<compile_context>
chip_gen: v5e
topology: v5e:2x2
jax: 0.10.0
libtpu: 0.0.40
codegen_flags: <defaults>
</compile_context>

<pallas_src>
import math

import jax
import jax.numpy as jnp
from jax.experimental import pallas as pl
from jax.experimental.pallas import tpu as pltpu


# Use VPU broadcast-FMAs instead of the MXU whenever the contraction dim is
# this small (the x skip path has K = input_dim = 2).
_SMALL_K_THRESHOLD = 8


def _small_k_matmul(x, w):
    """(B, K) @ (K, N) with tiny K as K broadcast-multiply-adds on the VPU.

    A K=2 matmul occupies <1% of a 256-wide MXU but still pays a full
    vmatmul push + result pop per layer; VALU slots have slack here.
    """
    k = x.shape[1]
    if k > _SMALL_K_THRESHOLD:
        return jnp.dot(x, w, preferred_element_type=jnp.float32)
    acc = x[:, 0:1] * w[0:1, :]
    for d in range(1, k):
        acc = acc + x[:, d : d + 1] * w[d : d + 1, :]
    return acc


def _mlp_kernel(x_ref, wx_all_ref, b_all_ref, wh_all_ref,
                wout_h_ref, wout_x_ref, b_out_ref, out_ref):
    """One batch tile of the full MLP forward; all params resident in VMEM."""
    x = x_ref[...]

    # --- first layer: relu(x @ W0 + b0); K = input_dim -> VPU path ----------
    h = jnp.maximum(_small_k_matmul(x, wx_all_ref[0]) + b_all_ref[0], 0.0)

    # --- hidden layers: relu(h @ Wh + x @ Wx + b) ----------------------------
    n_hidden = wh_all_ref.shape[0]
    for i in range(n_hidden):
        hh = jnp.dot(h, wh_all_ref[i], preferred_element_type=jnp.float32)
        hx = _small_k_matmul(x, wx_all_ref[i + 1])
        h = jnp.maximum(hh + hx + b_all_ref[i + 1], 0.0)

    # --- output layer: h @ Wout_h + x @ Wout_x + b_out -----------------------
    oh = jnp.dot(h, wout_h_ref[...], preferred_element_type=jnp.float32)
    ox = _small_k_matmul(x, wout_x_ref[...])
    out_ref[...] = (oh + ox + b_out_ref[...]).astype(out_ref.dtype)


def _init_linear(key, in_features, out_features):
    """PyTorch nn.Linear default init: U(-1/sqrt(in), 1/sqrt(in))."""
    kw, kb = jax.random.split(key)
    bound = 1.0 / math.sqrt(in_features)
    w = jax.random.uniform(
        kw, (out_features, in_features), jnp.float32, -bound, bound
    )
    b = jax.random.uniform(kb, (out_features,), jnp.float32, -bound, bound)
    return w, b


def init_mlp_params(key, input_dim=2, hidden_dim=10, output_dim=2, num_layers=3):
    keys = jax.random.split(key, num_layers + 1)
    params = [_init_linear(keys[0], input_dim, hidden_dim)]
    for i in range(num_layers - 1):
        params.append(_init_linear(keys[1 + i], hidden_dim + input_dim, hidden_dim))
    params.append(_init_linear(keys[num_layers], hidden_dim + input_dim, output_dim))
    return params


def pack_mlp_params(params, hidden_dim):
    """Pre-transpose / split / stack PyTorch-layout params ONCE (hoisted out of
    the per-call path).  Returns the 6 stacked operand arrays the kernel uses.
    Requires num_layers >= 2 (at least one hidden Linear)."""
    assert len(params) >= 3, "need first layer, >=1 hidden layer, output layer"
    w0, b0 = params[0]
    hidden = params[1:-1]
    w_out, b_out = params[-1]

    wx_list = [w0.T]                           # (input_dim, hidden_dim)
    b_list = [b0.reshape(1, -1)]
    wh_list = []
    for w, b in hidden:
        wh_list.append(w[:, :hidden_dim].T)    # (hidden_dim, hidden_dim)
        wx_list.append(w[:, hidden_dim:].T)    # (input_dim, hidden_dim)
        b_list.append(b.reshape(1, -1))

    wx_all = jnp.stack(wx_list)                # (num_layers, input_dim, hidden)
    b_all = jnp.stack(b_list)                  # (num_layers, 1, hidden)
    wh_all = jnp.stack(wh_list)                # (num_layers - 1, hidden, hidden)
    wout_h = w_out[:, :hidden_dim].T           # (hidden_dim, output_dim)
    wout_x = w_out[:, hidden_dim:].T           # (input_dim, output_dim)
    b_out = b_out.reshape(1, -1)               # (1, output_dim)
    return wx_all, b_all, wh_all, wout_h, wout_x, b_out


def mlp_forward_pallas(x, packed, *, tile_b=4096):
    """Full MLP forward, tiled over the batch dimension."""
    wx_all, b_all, wh_all, wout_h, wout_x, b_out = packed
    batch, input_dim = x.shape
    out_dim = wout_h.shape[1]

    # TILE_B budget: each buffered (TILE_B, <=128-lane) f32 tile at 4096 rows
    # is ~2 MiB; double-buffered x + out + live h fits far under the 32 MiB
    # scoped-VMEM default on v7x (64 MiB physical).
    tile_b = min(tile_b, batch)
    grid = (pl.cdiv(batch, tile_b),)

    def resident(shape):
        # Constant block index at every grid step -> fetched once, stays in VMEM.
        return pl.BlockSpec(shape, lambda i: (0,) * len(shape))

    return pl.pallas_call(
        _mlp_kernel,
        out_shape=jax.ShapeDtypeStruct((batch, out_dim), jnp.float32),
        grid=grid,
        in_specs=[
            pl.BlockSpec((tile_b, input_dim), lambda i: (i, 0)),
            resident(wx_all.shape),
            resident(b_all.shape),
            resident(wh_all.shape),
            resident(wout_h.shape),
            resident(wout_x.shape),
            resident(b_out.shape),
        ],
        out_specs=pl.BlockSpec((tile_b, out_dim), lambda i: (i, 0)),
        compiler_params=pltpu.CompilerParams(
            dimension_semantics=("parallel",)
        ),
    )(x, wx_all, b_all, wh_all, wout_h, wout_x, b_out)


def mlp_forward_ref(x, params, hidden_dim):
    """Pure-JAX reference with the same (concat-skip) semantics."""
    w0, b0 = params[0]
    h = jax.nn.relu(x @ w0.T + b0)
    for w, b in params[1:-1]:
        h = jax.nn.relu(jnp.concatenate([h, x], axis=-1) @ w.T + b)
    w, b = params[-1]
    return jnp.concatenate([h, x], axis=-1) @ w.T + b


if __name__ == "__main__":
    input_dim, hidden_dim, output_dim, num_layers = 2, 10, 2, 3
    batch = 8

    key = jax.random.PRNGKey(0)
    kx, kp = jax.random.split(key)
    x = jax.random.normal(kx, (batch, input_dim), jnp.float32)
    params = init_mlp_params(kp, input_dim, hidden_dim, output_dim, num_layers)

    # Operand prep is hoisted: pack once, reuse across calls.
    packed = pack_mlp_params(params, hidden_dim)

    out = mlp_forward_pallas(x, packed)
    out = jax.block_until_ready(out)

    ref = mlp_forward_ref(x, params, hidden_dim)
    assert out.shape == (batch, output_dim)
    assert jnp.allclose(out, ref, atol=1e-5, rtol=1e-5), "mismatch vs reference"

    print("KERNEL_OK")
</pallas_src>

<mosaic_0001>
module attributes {stable_mosaic.version = 11 : i64} {
  func.func @_mlp_kernel(%arg0: i32, %arg1: memref<8x2xf32, #tpu.memory_space<vmem>>, %arg2: memref<3x2x10xf32, #tpu.memory_space<vmem>>, %arg3: memref<3x1x10xf32, #tpu.memory_space<vmem>>, %arg4: memref<2x10x10xf32, #tpu.memory_space<vmem>>, %arg5: memref<10x2xf32, #tpu.memory_space<vmem>>, %arg6: memref<2x2xf32, #tpu.memory_space<vmem>>, %arg7: memref<1x2xf32, #tpu.memory_space<vmem>>, %arg8: memref<8x2xf32, #tpu.memory_space<vmem>>) attributes {dimension_semantics = [#tpu.dimension_semantics<parallel>], iteration_bounds = array<i64: 1>, scalar_prefetch = 0 : i64, scratch_operands = 0 : i64, tpu.core_type = #tpu.core_type<tc>, window_params = [{transform_indices = @transform_0, window_bounds = array<i64: 8, 2>}, {pipeline_mode = #tpu.pipeline_mode<synchronous>, transform_indices = @transform_1, window_bounds = array<i64: 3, 2, 10>}, {pipeline_mode = #tpu.pipeline_mode<synchronous>, transform_indices = @transform_2, window_bounds = array<i64: 3, 1, 10>}, {pipeline_mode = #tpu.pipeline_mode<synchronous>, transform_indices = @transform_3, window_bounds = array<i64: 2, 10, 10>}, {pipeline_mode = #tpu.pipeline_mode<synchronous>, transform_indices = @transform_4, window_bounds = array<i64: 10, 2>}, {pipeline_mode = #tpu.pipeline_mode<synchronous>, transform_indices = @transform_5, window_bounds = array<i64: 2, 2>}, {pipeline_mode = #tpu.pipeline_mode<synchronous>, transform_indices = @transform_6, window_bounds = array<i64: 1, 2>}, {transform_indices = @transform_7, window_bounds = array<i64: 8, 2>}]} {
    %c0 = arith.constant 0 : index
    %c0_0 = arith.constant 0 : index
    %0 = vector.load %arg1[%c0, %c0_0] : memref<8x2xf32, #tpu.memory_space<vmem>>, vector<8x2xf32>
    %c0_1 = arith.constant 0 : index
    %c0_2 = arith.constant 0 : index
    %c0_3 = arith.constant 0 : index
    %1 = vector.load %arg2[%c0_1, %c0_2, %c0_3] : memref<3x2x10xf32, #tpu.memory_space<vmem>>, vector<1x2x10xf32>
    %2 = vector.shape_cast %1 : vector<1x2x10xf32> to vector<2x10xf32>
    %3 = vector.extract_strided_slice %0 {offsets = [0, 0], sizes = [8, 1], strides = [1, 1]} : vector<8x2xf32> to vector<8x1xf32>
    %4 = vector.extract_strided_slice %2 {offsets = [0, 0], sizes = [1, 10], strides = [1, 1]} : vector<2x10xf32> to vector<1x10xf32>
    %5 = vector.broadcast %3 : vector<8x1xf32> to vector<8x10xf32>
    %6 = vector.broadcast %4 : vector<1x10xf32> to vector<8x10xf32>
    %7 = arith.mulf %5, %6 : vector<8x10xf32>
    %8 = vector.extract_strided_slice %0 {offsets = [0, 1], sizes = [8, 1], strides = [1, 1]} : vector<8x2xf32> to vector<8x1xf32>
    %9 = vector.extract_strided_slice %2 {offsets = [1, 0], sizes = [1, 10], strides = [1, 1]} : vector<2x10xf32> to vector<1x10xf32>
    %10 = vector.broadcast %8 : vector<8x1xf32> to vector<8x10xf32>
    %11 = vector.broadcast %9 : vector<1x10xf32> to vector<8x10xf32>
    %12 = arith.mulf %10, %11 : vector<8x10xf32>
    %13 = arith.addf %7, %12 : vector<8x10xf32>
    %c0_4 = arith.constant 0 : index
    %c0_5 = arith.constant 0 : index
    %c0_6 = arith.constant 0 : index
    %14 = vector.load %arg3[%c0_4, %c0_5, %c0_6] : memref<3x1x10xf32, #tpu.memory_space<vmem>>, vector<1x1x10xf32>
    %15 = vector.shape_cast %14 : vector<1x1x10xf32> to vector<1x10xf32>
    %16 = vector.broadcast %15 : vector<1x10xf32> to vector<8x10xf32>
    %17 = arith.addf %13, %16 : vector<8x10xf32>
    %cst = arith.constant 0.000000e+00 : f32
    %18 = vector.broadcast %cst : f32 to vector<8x10xf32>
    %19 = arith.maximumf %17, %18 : vector<8x10xf32>
    %c0_7 = arith.constant 0 : index
    %c0_8 = arith.constant 0 : index
    %c0_9 = arith.constant 0 : index
    %20 = vector.load %arg4[%c0_7, %c0_8, %c0_9] : memref<2x10x10xf32, #tpu.memory_space<vmem>>, vector<1x10x10xf32>
    %21 = vector.shape_cast %20 : vector<1x10x10xf32> to vector<10x10xf32>
    %cst_10 = arith.constant dense<0.000000e+00> : vector<8x10xf32>
    %22 = tpu.matmul %19, %21, %cst_10 {dimension_numbers = #tpu.dot_dimension_numbers<[1], [0], [0], [1], [0, 0, 1, 1], [], []>} : vector<8x10xf32>, vector<10x10xf32>, vector<8x10xf32> -> vector<8x10xf32>
    %c1 = arith.constant 1 : index
    %c0_11 = arith.constant 0 : index
    %c0_12 = arith.constant 0 : index
    %23 = vector.load %arg2[%c1, %c0_11, %c0_12] : memref<3x2x10xf32, #tpu.memory_space<vmem>>, vector<1x2x10xf32>
    %24 = vector.shape_cast %23 : vector<1x2x10xf32> to vector<2x10xf32>
    %25 = vector.extract_strided_slice %0 {offsets = [0, 0], sizes = [8, 1], strides = [1, 1]} : vector<8x2xf32> to vector<8x1xf32>
    %26 = vector.extract_strided_slice %24 {offsets = [0, 0], sizes = [1, 10], strides = [1, 1]} : vector<2x10xf32> to vector<1x10xf32>
    %27 = vector.broadcast %25 : vector<8x1xf32> to vector<8x10xf32>
    %28 = vector.broadcast %26 : vector<1x10xf32> to vector<8x10xf32>
    %29 = arith.mulf %27, %28 : vector<8x10xf32>
    %30 = vector.extract_strided_slice %0 {offsets = [0, 1], sizes = [8, 1], strides = [1, 1]} : vector<8x2xf32> to vector<8x1xf32>
    %31 = vector.extract_strided_slice %24 {offsets = [1, 0], sizes = [1, 10], strides = [1, 1]} : vector<2x10xf32> to vector<1x10xf32>
    %32 = vector.broadcast %30 : vector<8x1xf32> to vector<8x10xf32>
    %33 = vector.broadcast %31 : vector<1x10xf32> to vector<8x10xf32>
    %34 = arith.mulf %32, %33 : vector<8x10xf32>
    %35 = arith.addf %29, %34 : vector<8x10xf32>
    %36 = arith.addf %22, %35 : vector<8x10xf32>
    %c1_13 = arith.constant 1 : index
    %c0_14 = arith.constant 0 : index
    %c0_15 = arith.constant 0 : index
    %37 = vector.load %arg3[%c1_13, %c0_14, %c0_15] : memref<3x1x10xf32, #tpu.memory_space<vmem>>, vector<1x1x10xf32>
    %38 = vector.shape_cast %37 : vector<1x1x10xf32> to vector<1x10xf32>
    %39 = vector.broadcast %38 : vector<1x10xf32> to vector<8x10xf32>
    %40 = arith.addf %36, %39 : vector<8x10xf32>
    %cst_16 = arith.constant 0.000000e+00 : f32
    %41 = vector.broadcast %cst_16 : f32 to vector<8x10xf32>
    %42 = arith.maximumf %40, %41 : vector<8x10xf32>
    %c1_17 = arith.constant 1 : index
    %c0_18 = arith.constant 0 : index
    %c0_19 = arith.constant 0 : index
    %43 = vector.load %arg4[%c1_17, %c0_18, %c0_19] : memref<2x10x10xf32, #tpu.memory_space<vmem>>, vector<1x10x10xf32>
    %44 = vector.shape_cast %43 : vector<1x10x10xf32> to vector<10x10xf32>
    %cst_20 = arith.constant dense<0.000000e+00> : vector<8x10xf32>
    %45 = tpu.matmul %42, %44, %cst_20 {dimension_numbers = #tpu.dot_dimension_numbers<[1], [0], [0], [1], [0, 0, 1, 1], [], []>} : vector<8x10xf32>, vector<10x10xf32>, vector<8x10xf32> -> vector<8x10xf32>
    %c2 = arith.constant 2 : index
    %c0_21 = arith.constant 0 : index
    %c0_22 = arith.constant 0 : index
    %46 = vector.load %arg2[%c2, %c0_21, %c0_22] : memref<3x2x10xf32, #tpu.memory_space<vmem>>, vector<1x2x10xf32>
    %47 = vector.shape_cast %46 : vector<1x2x10xf32> to vector<2x10xf32>
    %48 = vector.extract_strided_slice %0 {offsets = [0, 0], sizes = [8, 1], strides = [1, 1]} : vector<8x2xf32> to vector<8x1xf32>
    %49 = vector.extract_strided_slice %47 {offsets = [0, 0], sizes = [1, 10], strides = [1, 1]} : vector<2x10xf32> to vector<1x10xf32>
    %50 = vector.broadcast %48 : vector<8x1xf32> to vector<8x10xf32>
    %51 = vector.broadcast %49 : vector<1x10xf32> to vector<8x10xf32>
    %52 = arith.mulf %50, %51 : vector<8x10xf32>
    %53 = vector.extract_strided_slice %0 {offsets = [0, 1], sizes = [8, 1], strides = [1, 1]} : vector<8x2xf32> to vector<8x1xf32>
    %54 = vector.extract_strided_slice %47 {offsets = [1, 0], sizes = [1, 10], strides = [1, 1]} : vector<2x10xf32> to vector<1x10xf32>
    %55 = vector.broadcast %53 : vector<8x1xf32> to vector<8x10xf32>
    %56 = vector.broadcast %54 : vector<1x10xf32> to vector<8x10xf32>
    %57 = arith.mulf %55, %56 : vector<8x10xf32>
    %58 = arith.addf %52, %57 : vector<8x10xf32>
    %59 = arith.addf %45, %58 : vector<8x10xf32>
    %c2_23 = arith.constant 2 : index
    %c0_24 = arith.constant 0 : index
    %c0_25 = arith.constant 0 : index
    %60 = vector.load %arg3[%c2_23, %c0_24, %c0_25] : memref<3x1x10xf32, #tpu.memory_space<vmem>>, vector<1x1x10xf32>
    %61 = vector.shape_cast %60 : vector<1x1x10xf32> to vector<1x10xf32>
    %62 = vector.broadcast %61 : vector<1x10xf32> to vector<8x10xf32>
    %63 = arith.addf %59, %62 : vector<8x10xf32>
    %cst_26 = arith.constant 0.000000e+00 : f32
    %64 = vector.broadcast %cst_26 : f32 to vector<8x10xf32>
    %65 = arith.maximumf %63, %64 : vector<8x10xf32>
    %c0_27 = arith.constant 0 : index
    %c0_28 = arith.constant 0 : index
    %66 = vector.load %arg5[%c0_27, %c0_28] : memref<10x2xf32, #tpu.memory_space<vmem>>, vector<10x2xf32>
    %cst_29 = arith.constant dense<0.000000e+00> : vector<8x2xf32>
    %67 = tpu.matmul %65, %66, %cst_29 {dimension_numbers = #tpu.dot_dimension_numbers<[1], [0], [0], [1], [0, 0, 1, 1], [], []>} : vector<8x10xf32>, vector<10x2xf32>, vector<8x2xf32> -> vector<8x2xf32>
    %c0_30 = arith.constant 0 : index
    %c0_31 = arith.constant 0 : index
    %68 = vector.load %arg6[%c0_30, %c0_31] : memref<2x2xf32, #tpu.memory_space<vmem>>, vector<2x2xf32>
    %69 = vector.extract_strided_slice %0 {offsets = [0, 0], sizes = [8, 1], strides = [1, 1]} : vector<8x2xf32> to vector<8x1xf32>
    %70 = vector.extract_strided_slice %68 {offsets = [0, 0], sizes = [1, 2], strides = [1, 1]} : vector<2x2xf32> to vector<1x2xf32>
    %71 = vector.broadcast %69 : vector<8x1xf32> to vector<8x2xf32>
    %72 = vector.broadcast %70 : vector<1x2xf32> to vector<8x2xf32>
    %73 = arith.mulf %71, %72 : vector<8x2xf32>
    %74 = vector.extract_strided_slice %0 {offsets = [0, 1], sizes = [8, 1], strides = [1, 1]} : vector<8x2xf32> to vector<8x1xf32>
    %75 = vector.extract_strided_slice %68 {offsets = [1, 0], sizes = [1, 2], strides = [1, 1]} : vector<2x2xf32> to vector<1x2xf32>
    %76 = vector.broadcast %74 : vector<8x1xf32> to vector<8x2xf32>
    %77 = vector.broadcast %75 : vector<1x2xf32> to vector<8x2xf32>
    %78 = arith.mulf %76, %77 : vector<8x2xf32>
    %79 = arith.addf %73, %78 : vector<8x2xf32>
    %80 = arith.addf %67, %79 : vector<8x2xf32>
    %c0_32 = arith.constant 0 : index
    %c0_33 = arith.constant 0 : index
    %81 = vector.load %arg7[%c0_32, %c0_33] : memref<1x2xf32, #tpu.memory_space<vmem>>, vector<1x2xf32>
    %82 = vector.broadcast %81 : vector<1x2xf32> to vector<8x2xf32>
    %83 = arith.addf %80, %82 : vector<8x2xf32>
    %c0_34 = arith.constant 0 : index
    %c0_35 = arith.constant 0 : index
    %84 = vector.load %arg8[%c0_34, %c0_35] : memref<8x2xf32, #tpu.memory_space<vmem>>, vector<8x2xf32>
    tpu.vector_store %arg8[%c0_34, %c0_35], %83 {strides = array<i32>} : memref<8x2xf32, #tpu.memory_space<vmem>>, vector<8x2xf32>,
    return
  }
  func.func @transform_0(%arg0: i32) -> (i32, i32) {
    %c0_i32 = arith.constant 0 : i32
    %c0_i32_0 = arith.constant 0 : i32
    return %arg0, %c0_i32 : i32, i32
  }
  func.func @transform_1(%arg0: i32) -> (i32, i32, i32) {
    %c0_i32 = arith.constant 0 : i32
    %c0_i32_0 = arith.constant 0 : i32
    %c0_i32_1 = arith.constant 0 : i32
    %c0_i32_2 = arith.constant 0 : i32
    return %c0_i32, %c0_i32_0, %c0_i32_1 : i32, i32, i32
  }
  func.func @transform_2(%arg0: i32) -> (i32, i32, i32) {
    %c0_i32 = arith.constant 0 : i32
    %c0_i32_0 = arith.constant 0 : i32
    %c0_i32_1 = arith.constant 0 : i32
    %c0_i32_2 = arith.constant 0 : i32
    return %c0_i32, %c0_i32_0, %c0_i32_1 : i32, i32, i32
  }
  func.func @transform_3(%arg0: i32) -> (i32, i32, i32) {
    %c0_i32 = arith.constant 0 : i32
    %c0_i32_0 = arith.constant 0 : i32
    %c0_i32_1 = arith.constant 0 : i32
    %c0_i32_2 = arith.constant 0 : i32
    return %c0_i32, %c0_i32_0, %c0_i32_1 : i32, i32, i32
  }
  func.func @transform_4(%arg0: i32) -> (i32, i32) {
    %c0_i32 = arith.constant 0 : i32
    %c0_i32_0 = arith.constant 0 : i32
    %c0_i32_1 = arith.constant 0 : i32
    return %c0_i32, %c0_i32_0 : i32, i32
  }
  func.func @transform_5(%arg0: i32) -> (i32, i32) {
    %c0_i32 = arith.constant 0 : i32
    %c0_i32_0 = arith.constant 0 : i32
    %c0_i32_1 = arith.constant 0 : i32
    return %c0_i32, %c0_i32_0 : i32, i32
  }
  func.func @transform_6(%arg0: i32) -> (i32, i32) {
    %c0_i32 = arith.constant 0 : i32
    %c0_i32_0 = arith.constant 0 : i32
    %c0_i32_1 = arith.constant 0 : i32
    return %c0_i32, %c0_i32_0 : i32, i32
  }
  func.func @transform_7(%arg0: i32) -> (i32, i32) {
    %c0_i32 = arith.constant 0 : i32
    %c0_i32_0 = arith.constant 0 : i32
    return %arg0, %c0_i32 : i32, i32
  }
}

</mosaic_0001>

<llo_original>
// kernel: tpu_custom_call.1
$region0: #{tpu_custom_call.1}
  #allocation0 [shape = 'u32[]', space=smem, size = 0x4, offset = 0x4, fixed_abs, tag = 'smem constant byte address 0x4 - core index']
  #allocation1 [shape = 'u32[72,128]{1,0:T(1,128)}', space=vmem, size = 0x9000, scoped, tag = 'internal scratch']
  %s0 = inlined_call_operand.vmem [shape: f32[8,2], index: 0, kind: input, shape index: {}]
  %s1 = inlined_call_operand.vmem [shape: f32[3,2,10], index: 1, kind: input, shape index: {}]
  %s2 = inlined_call_operand.vmem [shape: f32[3,1,10], index: 2, kind: input, shape index: {}]
  %s3 = inlined_call_operand.vmem [shape: f32[2,10,10], index: 3, kind: input, shape index: {}]
  %s4 = inlined_call_operand.vmem [shape: f32[10,2], index: 4, kind: input, shape index: {}]
  %s5 = inlined_call_operand.vmem [shape: f32[2,2], index: 5, kind: input, shape index: {}]
  %s6 = inlined_call_operand.vmem [shape: f32[1,2], index: 6, kind: input, shape index: {}]
  %s7 = inlined_call_operand.vmem [shape: f32[8,2], index: 7, kind: output, shape index: {}]
  %s8 = sld [smem:[#allocation0]]
  $region38: #{tpu_custom_call.1} parent=0
    _
  %s10 = ssub.s32 1, %s8
  %s11 = scalar_select 0, %s10, %s8
  // Predicated region
  $region2: #{tpu_custom_call.1} parent=0 // pred_check
    _
  $region3: #{tpu_custom_call.1} parent=0 // pred_check_branch
    %13 = sbr.rel (0) target = $region5
  $region4: #{tpu_custom_call.1} parent=0 // pred_region
    _
  $region5: #{tpu_custom_call.1} parent=0 // pred_fallthru
    _
  // Predicated region
  $region6: #{tpu_custom_call.1} parent=0 // pred_check
    _
  $region7: #{tpu_custom_call.1} parent=0 // pred_check_branch
    %15 = sbr.rel (0) target = $region9
  $region8: #{tpu_custom_call.1} parent=0 // pred_region
    _
  $region9: #{tpu_custom_call.1} parent=0 // pred_fallthru
    _
  // Predicated region
  $region10: #{tpu_custom_call.1} parent=0 // pred_check
    _
  $region11: #{tpu_custom_call.1} parent=0 // pred_check_branch
    %17 = sbr.rel (0) target = $region13
  $region12: #{tpu_custom_call.1} parent=0 // pred_region
    _
  $region13: #{tpu_custom_call.1} parent=0 // pred_fallthru
    _
  // Predicated region
  $region14: #{tpu_custom_call.1} parent=0 // pred_check
    _
  $region15: #{tpu_custom_call.1} parent=0 // pred_check_branch
    %19 = sbr.rel (0) target = $region17
  $region16: #{tpu_custom_call.1} parent=0 // pred_region
    _
  $region17: #{tpu_custom_call.1} parent=0 // pred_fallthru
    _
  // Predicated region
  $region18: #{tpu_custom_call.1} parent=0 // pred_check
    _
  $region19: #{tpu_custom_call.1} parent=0 // pred_check_branch
    %21 = sbr.rel (0) target = $region21
  $region20: #{tpu_custom_call.1} parent=0 // pred_region
    _
  $region21: #{tpu_custom_call.1} parent=0 // pred_fallthru
    _
  // Predicated region
  $region22: #{tpu_custom_call.1} parent=0 // pred_check
    _
  $region23: #{tpu_custom_call.1} parent=0 // pred_check_branch
    %23 = sbr.rel (0) target = $region25
  $region24: #{tpu_custom_call.1} parent=0 // pred_region
    _
  $region25: #{tpu_custom_call.1} parent=0 // pred_fallthru
    _
  // Predicated region
  $region26: #{tpu_custom_call.1} parent=0 // pred_check
    _
  $region27: #{tpu_custom_call.1} parent=0 // pred_check_branch
    %25 = sbr.rel (0) target = $region29
  $region28: #{tpu_custom_call.1} parent=0 // pred_region
    _
  $region29: #{tpu_custom_call.1} parent=0 // pred_fallthru
    _
  %v26 = vld [vmem:[%s0] sm:$0xff]
  %v27 = vld [vmem:[%s1] sm:$0x3]
  %29 = vset.pattern.permute.xlu0 0
  %30 = vperm.xlu0 %29, %v26
  %v31 = vpop.permute.xlu0 %30
  %v33 = vperm.slane %v27, 0
  %v34 = vmul.f32 %v31, %v33
  %35 = vset.pattern.permute.xlu0 1
  %36 = vperm.xlu0 %35, %v26
  %v37 = vpop.permute.xlu0 %36
  %v39 = vperm.slane %v27, 1
  %v40 = vmul.f32 %v37, %v39
  %v41 = vadd.f32 %v34, %v40
  %v42 = vld [vmem:[%s2] sm:$0x1]
  %v44 = vperm.slane %v42, 0
  %v46 = vadd.f32 %v41, %v44
  %v47 = vmax.f32 %v46, 0.0
  %v48 = vld [vmem:[%s3] sm:$0xff]
  %v49 = vld [vmem:[%s3 + $0x8] sm:$0x3]
  %s50 = scalar_lea.vmem %s1, 2
  %v51 = vld [vmem:[%s50] sm:$0x3]
  %v52 = vperm.slane %v51, 0
  %v53 = vmul.f32 %v31, %v52
  %v54 = vperm.slane %v51, 1
  %v55 = vmul.f32 %v37, %v54
  %v56 = vadd.f32 %v53, %v55
  %vm57 = vcmask 80896
  %v59 = vsel %vm57, %v47, 0
  %vm61 = vcmask 1041408
  %v63 = vsel %vm61, %v49, 0
  %65 = vmatpush.msra.mxu0 0.0
  %66 = vmatpush.msra.mxu0 0.0
  %67 = vmatpush.msra.mxu0 0.0
  %68 = vmatpush.msra.mxu0 0.0
  %69 = vmatpush.msra.mxu0 0.0
  %70 = vmatpush.msra.mxu0 0.0
  %71 = vmatpush.msra.mxu0 0.0
  %72 = vmatpush.msra.mxu0 0.0
  %73 = vmatpush.msra.mxu0 0.0
  %74 = vmatpush.msra.mxu0 0.0
  %75 = vmatpush.msra.mxu0 0.0
  %76 = vmatpush.msra.mxu0 0.0
  %77 = vmatpush.msra.mxu0 0.0
  %78 = vmatpush.msra.mxu0 0.0
  %79 = vmatpush.msra.mxu0 %v63
  %80 = vmatpush.msra.mxu0 %v48
  %81 = vmatmul.f32.gmra.mxu0 %v59
  %v82 = vpop.f32.mrf.mxu0
  %v83 = vadd.f32 %v56, %v82
  %84 = vdwg.mxu0
  %s85 = scalar_lea.vmem %s2, 1
  %v86 = vld [vmem:[%s85] sm:$0x1]
  %v88 = vperm.slane %v86, 0
  %v90 = vadd.f32 %v83, %v88
  %v91 = vmax.f32 %v90, 0.0
  %s92 = scalar_lea.vmem %s3, 16
  %v93 = vld [vmem:[%s92] sm:$0xff]
  %v94 = vld [vmem:[%s92 + $0x8] sm:$0x3]
  %s95 = scalar_lea.vmem %s1, 4
  %v96 = vld [vmem:[%s95] sm:$0x3]
  %v97 = vperm.slane %v96, 0
  %v98 = vmul.f32 %v31, %v97
  %v99 = vperm.slane %v96, 1
  %v100 = vmul.f32 %v37, %v99
  %v101 = vadd.f32 %v98, %v100
  %v103 = vsel %vm57, %v91, 0
  %v106 = vsel %vm61, %v94, 0
  %108 = vmatpush.msra.mxu0 0.0
  %109 = vmatpush.msra.mxu0 0.0
  %110 = vmatpush.msra.mxu0 0.0
  %111 = vmatpush.msra.mxu0 0.0
  %112 = vmatpush.msra.mxu0 0.0
  %113 = vmatpush.msra.mxu0 0.0
  %114 = vmatpush.msra.mxu0 0.0
  %115 = vmatpush.msra.mxu0 0.0
  %116 = vmatpush.msra.mxu0 0.0
  %117 = vmatpush.msra.mxu0 0.0
  %118 = vmatpush.msra.mxu0 0.0
  %119 = vmatpush.msra.mxu0 0.0
  %120 = vmatpush.msra.mxu0 0.0
  %121 = vmatpush.msra.mxu0 0.0
  %122 = vmatpush.msra.mxu0 %v106
  %123 = vmatpush.msra.mxu0 %v93
  %124 = vmatmul.f32.gmra.mxu0 %v103
  %v125 = vpop.f32.mrf.mxu0
  %v126 = vadd.f32 %v101, %v125
  %127 = vdwg.mxu0
  %s128 = scalar_lea.vmem %s2, 2
  %v129 = vld [vmem:[%s128] sm:$0x1]
  %v131 = vperm.slane %v129, 0
  %v133 = vadd.f32 %v126, %v131
  %v134 = vmax.f32 %v133, 0.0
  %v135 = vld [vmem:[%s4] sm:$0xff]
  %v136 = vld [vmem:[%s4 + $0x8] sm:$0x3]
  %v137 = vld [vmem:[%s5] sm:$0x3]
  %v138 = vperm.slane %v137, 0
  %v139 = vmul.f32 %v31, %v138
  %v140 = vperm.slane %v137, 1
  %v141 = vmul.f32 %v37, %v140
  %v142 = vadd.f32 %v139, %v141
  %v144 = vsel %vm57, %v134, 0
  %v147 = vsel %vm61, %v136, 0
  %149 = vmatpush.msra.mxu0 0.0
  %150 = vmatpush.msra.mxu0 0.0
  %151 = vmatpush.msra.mxu0 0.0
  %152 = vmatpush.msra.mxu0 0.0
  %153 = vmatpush.msra.mxu0 0.0
  %154 = vmatpush.msra.mxu0 0.0
  %155 = vmatpush.msra.mxu0 0.0
  %156 = vmatpush.msra.mxu0 0.0
  %157 = vmatpush.msra.mxu0 0.0
  %158 = vmatpush.msra.mxu0 0.0
  %159 = vmatpush.msra.mxu0 0.0
  %160 = vmatpush.msra.mxu0 0.0
  %161 = vmatpush.msra.mxu0 0.0
  %162 = vmatpush.msra.mxu0 0.0
  %163 = vmatpush.msra.mxu0 %v147
  %164 = vmatpush.msra.mxu0 %v135
  %165 = vmatmul.f32.gmra.mxu0 %v144
  %v166 = vpop.f32.mrf.mxu0
  %v167 = vadd.f32 %v142, %v166
  %168 = vdwg.mxu0
  %v169 = vld [vmem:[%s6] sm:$0x1]
  %v171 = vperm.slane %v169, 0
  %v173 = vadd.f32 %v167, %v171
  %vm174 = vcmask 15360
  %175 = vst.msk [vmem:[%s7] sm:$0xff] %vm174, %v173
  // Predicated region
  $region30: #{tpu_custom_call.1} parent=0 // pred_check
    _
  $region31: #{tpu_custom_call.1} parent=0 // pred_check_branch
    %177 = sbr.rel (0) target = $region33
  $region32: #{tpu_custom_call.1} parent=0 // pred_region
    _
  $region33: #{tpu_custom_call.1} parent=0 // pred_fallthru
    _
  // Predicated region
  $region34: #{tpu_custom_call.1} parent=0 // pred_check
    _
  $region35: #{tpu_custom_call.1} parent=0 // pred_check_branch
    %179 = sbr.rel (0) target = $region37
  $region36: #{tpu_custom_call.1} parent=0 // pred_region
    _
  $region37: #{tpu_custom_call.1} parent=0 // pred_fallthru
    _

</llo_original>
